<compile_context>
chip_gen: v7x
topology: tpu7x:2x2x1
jax: 0.10.0
libtpu: 0.0.40
codegen_flags: <defaults>
</compile_context>

<pallas_src>
import functools

import jax
import jax.numpy as jnp
from jax.experimental import pallas as pl
from jax.experimental.pallas import tpu as pltpu

VMEM_LIMIT_BYTES = 40 * 1024 * 1024  # > 32 MiB default, < v7x's 64 MiB physical


def _leaky(v, negative_slope):
    return jnp.where(v > 0, v, negative_slope * v)


# --------------------------------------------------------------------------
# Kernel A: layer-1 feature transform  h1 = x @ W1_all   (head-major columns)
# --------------------------------------------------------------------------
def _feat_kernel(x_ref, w_ref, h_ref, *, mxu_dtype):
    h_ref[...] = jnp.dot(x_ref[...].astype(mxu_dtype),
                         w_ref[...].astype(mxu_dtype),
                         preferred_element_type=jnp.float32)


# --------------------------------------------------------------------------
# Kernel B: layer-1 attention (all heads) + ELU + layer-2 feature transform,
#           producing h2[tile] = ELU(GAT1(x))[tile] @ W2_pad  (bias-free).
# --------------------------------------------------------------------------
def _layer1_kernel(h1_ref, adst_bd_ref, asrc_rows_ref, b1_ref, w2_ref,
                   amask_ref, h2_ref, *, heads, c_head, negative_slope,
                   tile_m, mxu_dtype, exp_dtype):
    i = pl.program_id(0)
    r0 = pl.multiple_of(i * tile_m, tile_m)

    h1_full = h1_ref[...]                              # (N, H*C)  f32, resident
    h1_dst = h1_ref[pl.ds(r0, tile_m), :]              # (TM, H*C) rows of this tile
    amask = amask_ref[...]                             # (TM, N)   f32
    b1 = b1_ref[...]                                   # (1, H*C)

    # batched per-head attention logits (block-diagonal att matrices)
    adst = jnp.dot(h1_dst, adst_bd_ref[...],
                   preferred_element_type=jnp.float32)                 # (TM, H)
    asrc = jax.lax.dot_general(asrc_rows_ref[...], h1_full,
                               (((1,), (1,)), ((), ())),
                               preferred_element_type=jnp.float32)     # (H, N)

    ncls_pad = w2_ref.shape[1]
    acc = jnp.zeros((tile_m, ncls_pad), jnp.float32)

    for h in range(heads):                   # per-head work folded into acc
        lo, hi = h * c_head, (h + 1) * c_head
        e = _leaky(adst[:, h:h + 1] + asrc[h:h + 1, :], negative_slope) + amask
        m = jnp.max(e, axis=-1, keepdims=True)                         # f32
        p = jnp.exp((e - m).astype(exp_dtype))                         # EUP
        l = jnp.sum(p.astype(jnp.float32), axis=-1, keepdims=True)     # f32
        inv = pl.reciprocal(l, approx=True)                            # (TM, 1)
        # normalize after the aggregation matmul (per-row scalar)
        agg = jnp.dot(p.astype(mxu_dtype),
                      h1_ref[:, lo:hi].astype(mxu_dtype),
                      preferred_element_type=jnp.float32) * inv        # (TM, C)
        x1_h = agg + b1[:, lo:hi]
        # ELU; clamp the negative branch so the discarded lane can't overflow
        x1_h = jnp.where(x1_h > 0, x1_h, jnp.exp(jnp.minimum(x1_h, 0.0)) - 1.0)
        acc = acc + jnp.dot(x1_h, w2_ref[lo:hi, :],
                            preferred_element_type=jnp.float32)        # (TM, P)

    h2_ref[...] = acc


# --------------------------------------------------------------------------
# Kernel C: layer-2 attention (single head, concat=False) -> padded logits
# --------------------------------------------------------------------------
def _layer2_kernel(h2_ref, ad2_ref, as2_ref, b2_ref, amask_ref, out_ref,
                   *, negative_slope, tile_m, mxu_dtype, exp_dtype):
    i = pl.program_id(0)
    r0 = pl.multiple_of(i * tile_m, tile_m)

    h2_full = h2_ref[...]                               # (N, P) f32, resident
    h2_dst = h2_ref[pl.ds(r0, tile_m), :]               # (TM, P)
    amask = amask_ref[...]                               # (TM, N)

    adst = jnp.sum(h2_dst * ad2_ref[...], axis=-1, keepdims=True)       # (TM, 1)
    asrc = jax.lax.dot_general(as2_ref[...], h2_full,
                               (((1,), (1,)), ((), ())),
                               preferred_element_type=jnp.float32)      # (1, N)

    e = _leaky(adst + asrc, negative_slope) + amask
    m = jnp.max(e, axis=-1, keepdims=True)
    p = jnp.exp((e - m).astype(exp_dtype))
    l = jnp.sum(p.astype(jnp.float32), axis=-1, keepdims=True)
    inv = pl.reciprocal(l, approx=True)
    agg = jnp.dot(p.astype(mxu_dtype), h2_full.astype(mxu_dtype),
                  preferred_element_type=jnp.float32) * inv             # (TM, P)
    out_ref[...] = agg + b2_ref[...]


# --------------------------------------------------------------------------
# Wrapper: three tiled pallas_calls (the x1/h2 HBM round-trip is negligible
# next to the (N, N) amask traffic, per review).
# --------------------------------------------------------------------------
def gat_forward(x, w1_all, adst1_bd, asrc1_rows, b1_row, w2_pad,
                ad2_row, as2_row, b2_row, amask, *, heads, c_head,
                negative_slope=0.2, tile_m=512,
                mxu_dtype=jnp.bfloat16, exp_dtype=jnp.bfloat16):
    """Fused two-layer GAT forward. Returns padded (N, ncls_pad) logits."""
    n, f_in = x.shape
    hid = heads * c_head
    ncls_pad = w2_pad.shape[1]

    tile_m = min(tile_m, n)
    assert n % tile_m == 0 and tile_m % 8 == 0, "tile_m must divide N, mult of 8"
    n_tiles = n // tile_m

    cparams = pltpu.CompilerParams(dimension_semantics=("parallel",),
                                   vmem_limit_bytes=VMEM_LIMIT_BYTES)

    # ---- kernel A: h1 = x @ W1_all -------------------------------------
    h1 = pl.pallas_call(
        functools.partial(_feat_kernel, mxu_dtype=mxu_dtype),
        out_shape=jax.ShapeDtypeStruct((n, hid), jnp.float32),
        grid=(n_tiles,),
        in_specs=[pl.BlockSpec((tile_m, f_in), lambda i: (i, 0)),
                  pl.BlockSpec((f_in, hid), lambda i: (0, 0))],
        out_specs=pl.BlockSpec((tile_m, hid), lambda i: (i, 0)),
        compiler_params=cparams,
    )(x, w1_all)

    # ---- kernel B: layer-1 attention + ELU + layer-2 transform ---------
    h2 = pl.pallas_call(
        functools.partial(_layer1_kernel, heads=heads, c_head=c_head,
                          negative_slope=negative_slope, tile_m=tile_m,
                          mxu_dtype=mxu_dtype, exp_dtype=exp_dtype),
        out_shape=jax.ShapeDtypeStruct((n, ncls_pad), jnp.float32),
        grid=(n_tiles,),
        in_specs=[pl.BlockSpec((n, hid), lambda i: (0, 0)),        # h1 resident
                  pl.BlockSpec((hid, heads), lambda i: (0, 0)),    # adst1_bd
                  pl.BlockSpec((heads, hid), lambda i: (0, 0)),    # asrc1_rows
                  pl.BlockSpec((1, hid), lambda i: (0, 0)),        # b1
                  pl.BlockSpec((hid, ncls_pad), lambda i: (0, 0)), # W2 (padded)
                  pl.BlockSpec((tile_m, n), lambda i: (i, 0))],    # amask tile
        out_specs=pl.BlockSpec((tile_m, ncls_pad), lambda i: (i, 0)),
        compiler_params=cparams,
    )(h1, adst1_bd, asrc1_rows, b1_row, w2_pad, amask)

    # ---- kernel C: layer-2 attention -> padded logits -------------------
    out = pl.pallas_call(
        functools.partial(_layer2_kernel, negative_slope=negative_slope,
                          tile_m=tile_m, mxu_dtype=mxu_dtype,
                          exp_dtype=exp_dtype),
        out_shape=jax.ShapeDtypeStruct((n, ncls_pad), jnp.float32),
        grid=(n_tiles,),
        in_specs=[pl.BlockSpec((n, ncls_pad), lambda i: (0, 0)),   # h2 resident
                  pl.BlockSpec((1, ncls_pad), lambda i: (0, 0)),   # att_dst row
                  pl.BlockSpec((1, ncls_pad), lambda i: (0, 0)),   # att_src row
                  pl.BlockSpec((1, ncls_pad), lambda i: (0, 0)),   # bias row
                  pl.BlockSpec((tile_m, n), lambda i: (i, 0))],    # amask tile
        out_specs=pl.BlockSpec((tile_m, ncls_pad), lambda i: (i, 0)),
        compiler_params=cparams,
    )(h2, ad2_row, as2_row, b2_row, amask)
    return out


def gat_ref(x, W1, as1, ad1, b1, W2, as2, ad2, b2, amask, negative_slope):
    """Pure-JAX reference of the same forward (per-head formulation, f32)."""
    def leaky(v):
        return jnp.where(v > 0, v, negative_slope * v)

    h = jnp.einsum('nf,hfc->hnc', x, W1)                      # (H, N, C)
    a_src = jnp.einsum('hnc,hc->hn', h, as1)
    a_dst = jnp.einsum('hnc,hc->hn', h, ad1)
    e = leaky(a_dst[:, :, None] + a_src[:, None, :]) + amask[None]
    alpha = jax.nn.softmax(e, axis=-1)
    out = jnp.einsum('hij,hjc->hic', alpha, h) + b1[:, None, :]
    out = jnp.where(out > 0, out, jnp.exp(out) - 1.0)          # ELU
    x1 = jnp.transpose(out, (1, 0, 2)).reshape(x.shape[0], -1)  # concat heads

    h2 = x1 @ W2
    e2 = leaky((h2 @ ad2)[:, None] + (h2 @ as2)[None, :]) + amask
    alpha2 = jax.nn.softmax(e2, axis=-1)
    return alpha2 @ h2 + b2[None, :]


if __name__ == "__main__":
    # small shapes consistent with the module defaults (Cora-style params)
    N, F_IN, N_CLASSES, HEADS, C_HEAD = 16, 16, 4, 8, 8
    HID = HEADS * C_HEAD
    NCLS_PAD = 128                       # lane-dense output slab (review item)
    NEG_SLOPE = 0.2
    TILE_M = 8                           # 2 dst tiles -> exercises the grid

    key = jax.random.PRNGKey(0)
    ks = jax.random.split(key, 10)

    x = jax.random.normal(ks[0], (N, F_IN), jnp.float32)

    # dense adjacency with positive scalar edge weights
    edge_on = jax.random.bernoulli(ks[1], 0.3, (N, N))
    weights = jax.random.uniform(ks[2], (N, N), jnp.float32, 0.5, 1.5)
    adj = jnp.where(edge_on, weights, 0.0)

    # Additive attention-logit term (matches GATConv.message with scalar edge_attr):
    #   remove_self_loops -> add_self_loops(fill_value=1.0) -> alpha += 1 - 1/w,
    #   non-edges excluded from the per-destination softmax via -1e30.
    eye = jnp.eye(N, dtype=bool)
    off_edge = (adj != 0) & ~eye
    valid = off_edge | eye
    w_safe = jnp.where(off_edge, adj, 1.0)
    amask = (jnp.where(off_edge, 1.0 - 1.0 / w_safe, 0.0)
             + jnp.where(valid, 0.0, -1e30)).astype(jnp.float32)

    def glorot(k, shape, fan_in, fan_out):
        s = jnp.sqrt(2.0 / (fan_in + fan_out))
        return (s * jax.random.normal(k, shape)).astype(jnp.float32)

    # layer 1: in=F_IN, C_HEAD per head, HEADS heads, concat=True
    W1 = glorot(ks[3], (HEADS, F_IN, C_HEAD), F_IN, HID)
    as1 = glorot(ks[4], (HEADS, C_HEAD), C_HEAD, 1)
    ad1 = glorot(ks[5], (HEADS, C_HEAD), C_HEAD, 1)
    b1 = jnp.zeros((HEADS, C_HEAD), jnp.float32)

    # layer 2: in=HEADS*C_HEAD, out=N_CLASSES, 1 head, concat=False
    W2 = glorot(ks[6], (HID, N_CLASSES), HID, N_CLASSES)
    as2 = glorot(ks[7], (N_CLASSES,), N_CLASSES, 1)
    ad2 = glorot(ks[8], (N_CLASSES,), N_CLASSES, 1)
    b2 = jnp.zeros((N_CLASSES,), jnp.float32)

    # ---- one-time host-side packing into kernel-friendly layouts ----
    w1_all = jnp.transpose(W1, (1, 0, 2)).reshape(F_IN, HID)   # (Fin, H*C)
    eyeH = jnp.eye(HEADS, dtype=jnp.float32)
    # block-diagonal att matrices: adst1_bd[h*C+c, h]=ad1[h,c]; asrc1_rows[h, h*C+c]=as1[h,c]
    adst1_bd = (ad1[:, :, None] * eyeH[:, None, :]).reshape(HID, HEADS)
    asrc1_rows = (eyeH[:, :, None] * as1[None, :, :]).reshape(HEADS, HID)
    b1_row = b1.reshape(1, HID)
    # layer-2 params zero-padded to a lane-dense 128-wide slab (pad cols stay 0)
    w2_pad = jnp.zeros((HID, NCLS_PAD), jnp.float32).at[:, :N_CLASSES].set(W2)
    ad2_row = jnp.zeros((1, NCLS_PAD), jnp.float32).at[0, :N_CLASSES].set(ad2)
    as2_row = jnp.zeros((1, NCLS_PAD), jnp.float32).at[0, :N_CLASSES].set(as2)
    b2_row = jnp.zeros((1, NCLS_PAD), jnp.float32).at[0, :N_CLASSES].set(b2)

    args = (x, w1_all, adst1_bd, asrc1_rows, b1_row, w2_pad,
            ad2_row, as2_row, b2_row, amask)
    kw = dict(heads=HEADS, c_head=C_HEAD, negative_slope=NEG_SLOPE, tile_m=TILE_M)

    ref = gat_ref(x, W1, as1, ad1, b1, W2, as2, ad2, b2, amask, NEG_SLOPE)

    # 1) full-f32 path: tight semantic check (tolerance covers approx reciprocal)
    out_f32 = gat_forward(*args, mxu_dtype=jnp.float32, exp_dtype=jnp.float32, **kw)
    out_f32 = jax.block_until_ready(out_f32)
    logits_f32 = out_f32[:, :N_CLASSES]
    assert logits_f32.shape == (N, N_CLASSES)
    assert bool(jnp.all(out_f32[:, N_CLASSES:] == 0.0)), "pad lanes not zero"
    assert jnp.allclose(logits_f32, ref, rtol=1e-2, atol=1e-2), "f32 mismatch vs reference"

    # 2) default mixed-precision path (bf16 MXU operands + bf16 softmax exp,
    #    targeting v6e/v7x; on v5e pass float32 dtypes instead). Looser
    #    tolerance reflects bf16 rounding through two layers.
    out_bf16 = gat_forward(*args, **kw)
    out_bf16 = jax.block_until_ready(out_bf16)
    logits_bf16 = out_bf16[:, :N_CLASSES]
    assert jnp.allclose(logits_bf16, ref, rtol=1e-1, atol=1e-1), "bf16 mismatch vs reference"

    print("KERNEL_OK")
</pallas_src>

<mosaic_0001>
module attributes {stable_mosaic.version = 11 : i64} {
  func.func @_feat_kernel(%arg0: i32, %arg1: memref<8x16xf32, #tpu.memory_space<vmem>>, %arg2: memref<16x64xf32, #tpu.memory_space<vmem>>, %arg3: memref<8x64xf32, #tpu.memory_space<vmem>>) attributes {dimension_semantics = [#tpu.dimension_semantics<parallel>], iteration_bounds = array<i64: 2>, scalar_prefetch = 0 : i64, scratch_operands = 0 : i64, tpu.core_type = #tpu.core_type<tc>, window_params = [{transform_indices = @transform_0, window_bounds = array<i64: 8, 16>}, {pipeline_mode = #tpu.pipeline_mode<synchronous>, transform_indices = @transform_1, window_bounds = array<i64: 16, 64>}, {transform_indices = @transform_2, window_bounds = array<i64: 8, 64>}]} {
    %c0 = arith.constant 0 : index
    %c0_0 = arith.constant 0 : index
    %0 = vector.load %arg1[%c0, %c0_0] : memref<8x16xf32, #tpu.memory_space<vmem>>, vector<8x16xf32>
    %c0_1 = arith.constant 0 : index
    %c0_2 = arith.constant 0 : index
    %1 = vector.load %arg2[%c0_1, %c0_2] : memref<16x64xf32, #tpu.memory_space<vmem>>, vector<16x64xf32>
    %cst = arith.constant dense<0.000000e+00> : vector<8x64xf32>
    %2 = tpu.matmul %0, %1, %cst {dimension_numbers = #tpu.dot_dimension_numbers<[1], [0], [0], [1], [0, 0, 1, 1], [], []>} : vector<8x16xf32>, vector<16x64xf32>, vector<8x64xf32> -> vector<8x64xf32>
    %c0_3 = arith.constant 0 : index
    %c0_4 = arith.constant 0 : index
    %3 = vector.load %arg3[%c0_3, %c0_4] : memref<8x64xf32, #tpu.memory_space<vmem>>, vector<8x64xf32>
    tpu.vector_store %arg3[%c0_3, %c0_4], %2 {strides = array<i32>} : memref<8x64xf32, #tpu.memory_space<vmem>>, vector<8x64xf32>,
    return
  }
  func.func @transform_0(%arg0: i32) -> (i32, i32) {
    %c0_i32 = arith.constant 0 : i32
    %c0_i32_0 = arith.constant 0 : i32
    return %arg0, %c0_i32 : i32, i32
  }
  func.func @transform_1(%arg0: i32) -> (i32, i32) {
    %c0_i32 = arith.constant 0 : i32
    %c0_i32_0 = arith.constant 0 : i32
    %c0_i32_1 = arith.constant 0 : i32
    return %c0_i32, %c0_i32_0 : i32, i32
  }
  func.func @transform_2(%arg0: i32) -> (i32, i32) {
    %c0_i32 = arith.constant 0 : i32
    %c0_i32_0 = arith.constant 0 : i32
    return %arg0, %c0_i32 : i32, i32
  }
}

</mosaic_0001>

<llo_original>
// kernel: tpu_custom_call.1
$region0: #{tpu_custom_call.1}
  #allocation0 [shape = 'u32[]', space=smem, size = 0x4, offset = 0x4, fixed_abs, tag = 'smem constant byte address 0x4 - core index']
  #allocation1 [shape = 'u32[144,128]{1,0:T(1,128)}', space=vmem, size = 0x12000, scoped, tag = 'internal scratch']
  %s0 = inlined_call_operand.hbm [shape: f32[16,16], index: 0, kind: input, shape index: {}]
  %s1 = inlined_call_operand.hbm [shape: f32[16,64], index: 1, kind: input, shape index: {}]
  %s2 = inlined_call_operand.hbm [shape: f32[16,64], index: 2, kind: output, shape index: {}]
  %s3 = sld [smem:[#allocation0]]
  $region49: #{tpu_custom_call.1} parent=0
    _
  %s5 = ssub.s32 1, %s3
  %s6 = scalar_select 0, %s5, %s3
  $region1: #{tpu_custom_call.1} parent=0
    #allocation2 [shape = 'u8[8192]{0}', space=vmem, size = 0x2000, scoped, tag = 'input window, operand 0']
    #allocation3 [shape = 's32[2]{0}', space=sflag, size = 0x8, scoped, tag = 'scoped memory for tpu_custom_call.1']
    #allocation4 [shape = 's32[2]{0}', space=sflag, size = 0x8, scoped, tag = 'scoped memory for tpu_custom_call.1']
    #allocation5 [shape = 'u8[8192]{0}', space=vmem, size = 0x2000, scoped, tag = 'input window, operand 1, single buffered']
    #allocation6 [shape = 's32[1]{0}', space=sflag, size = 0x4, scoped, tag = 'scoped memory for tpu_custom_call.1']
    #allocation7 [shape = 'u8[8192]{0}', space=vmem, size = 0x2000, scoped, tag = 'output window, operand 0']
    %7 = vsyncpa [#allocation3], 0
    %s8 = scalar_lea.sflag [#allocation3], 1
    %9 = vsyncpa %s8, 0
    %10 = vsyncpa [#allocation6], 0
    %11 = vsyncpa [#allocation4], 0
    %s12 = scalar_lea.sflag [#allocation4], 1
    %13 = vsyncpa %s12, 0
    loop: start=0, step=1, limit=4
    $region2: #{tpu_custom_call.1} parent=1 // loop_pre_header
      _
    $region3: #{tpu_custom_call.1} parent=1 // loop_header
      %s15 = sphi 0, %s19
      %p16 = scmp.ge.s32.totalorder %s15, 4
      %s25 = sphi 0, %s27
      %s28 = sphi 0, %s25
      %s29 = sphi 0, %s28
      %s45 = sphi 0, %s29
      %s49 = sphi 0, %s49
      %s51 = sphi 0, %s49
      %s52 = sphi 0, %s51
      %s66 = sphi 0, %s52
      %s72 = sphi 0, %s74
      %s75 = sphi 0, %s72
      %s76 = sphi 0, %s75
      %s92 = sphi 0, %s76
    $region4: #{tpu_custom_call.1} parent=1 // loop_header_branch
      %18 = sbr.rel (%p16) target = $region8
    $region5: #{tpu_custom_call.1} parent=1 // loop_body
      %s20 = ssub.s32 %s15, 1
      %s21 = ssub.s32 %s15, 2
      %s22 = sadd.s32 %s15, 1
      %s23 = ssub.s32 %s15, %s22
      %p24 = scmp.eq.s32.totalorder %s23, 0
      %s26 = sadd.s32 %s25, 1
      %s27 = scalar_select %p24, %s25, %s26
      %p30 = pneg %p24
      %p31 = scmp.eq.s32.totalorder %s15, 1
      %p32 = por %p30, %p31
      %p33 = scmp.ne.s32.totalorder %s25, %s28
      %p34 = scmp.eq.s32.totalorder %s15, 0
      %p35 = por %p33, %p34
      %p36 = scmp.ne.s32.totalorder %s25, %s28
      %p37 = scmp.eq.s32.totalorder %s20, 1
      %p38 = por %p36, %p37
      %p39 = scmp.ne.s32.totalorder %s28, %s29
      %p40 = scmp.eq.s32.totalorder %s20, 0
      %p41 = por %p39, %p40
      %p42 = scmp.ne.s32.totalorder %s28, %s29
      %p43 = scmp.eq.s32.totalorder %s21, 1
      %p44 = por %p42, %p43
      %p46 = scmp.ne.s32.totalorder %s29, %s45
      %p47 = scmp.eq.s32.totalorder %s21, 0
      %p48 = por %p46, %p47
      %s50 = sadd.s32 %s49, 1
      %p53 = scmp.eq.s32.totalorder %s15, 1
      %p54 = scmp.ne.s32.totalorder %s49, %s51
      %p55 = scmp.eq.s32.totalorder %s15, 0
      %p56 = por %p54, %p55
      %p57 = scmp.ne.s32.totalorder %s49, %s51
      %p58 = scmp.eq.s32.totalorder %s20, 1
      %p59 = por %p57, %p58
      %p60 = scmp.ne.s32.totalorder %s51, %s52
      %p61 = scmp.eq.s32.totalorder %s20, 0
      %p62 = por %p60, %p61
      %p63 = scmp.ne.s32.totalorder %s51, %s52
      %p64 = scmp.eq.s32.totalorder %s21, 1
      %p65 = por %p63, %p64
      %p67 = scmp.ne.s32.totalorder %s52, %s66
      %p68 = scmp.eq.s32.totalorder %s21, 0
      %p69 = por %p67, %p68
      %s70 = ssub.s32 %s15, %s22
      %p71 = scmp.eq.s32.totalorder %s70, 0
      %s73 = sadd.s32 %s72, 1
      %s74 = scalar_select %p71, %s72, %s73
      %p77 = pneg %p71
      %p78 = scmp.eq.s32.totalorder %s15, 1
      %p79 = por %p77, %p78
      %p80 = scmp.ne.s32.totalorder %s72, %s75
      %p81 = scmp.eq.s32.totalorder %s15, 0
      %p82 = por %p80, %p81
      %p83 = scmp.ne.s32.totalorder %s72, %s75
      %p84 = scmp.eq.s32.totalorder %s20, 1
      %p85 = por %p83, %p84
      %p86 = scmp.ne.s32.totalorder %s75, %s76
      %p87 = scmp.eq.s32.totalorder %s20, 0
      %p88 = por %p86, %p87
      %p89 = scmp.ne.s32.totalorder %s75, %s76
      %p90 = scmp.eq.s32.totalorder %s21, 1
      %p91 = por %p89, %p90
      %p93 = scmp.ne.s32.totalorder %s76, %s92
      %p94 = scmp.eq.s32.totalorder %s21, 0
      %p95 = por %p93, %p94
      %p96 = scmp.le.s32.totalorder 1, %s15
      %p97 = scmp.lt.s32.totalorder %s15, 3
      %p98 = pnand %p96, %p97
      %p99 = pneg %p98
      // Predicated region
      $region9: #{tpu_custom_call.1} parent=5 // pred_check
        _
      $region10: #{tpu_custom_call.1} parent=5 // pred_check_branch
        %101 = sbr.rel (%p98) target = $region12
      $region11: #{tpu_custom_call.1} parent=5 // pred_region
        %s102 = ssub.s32 %s15, 1
        // Predicated region
        $region13: #{tpu_custom_call.1} parent=11 // pred_check
          %p103 = pneg %p62
        $region14: #{tpu_custom_call.1} parent=11 // pred_check_branch
          %105 = sbr.rel (%p103) target = $region16
        $region15: #{tpu_custom_call.1} parent=11 // pred_region
          %s107 = ssub.s32 256, 256
          %108 = vsyncadd [#allocation6], %s107
          %s109 = sshll.u32 [#allocation5], 4
          %s110 = int_to_ptr.vmem [resolvable:$true] %s109
          %115 = dma.hbm_to_vmem [thread:$0]  %s1, 256, %s110, [#allocation6], 128, 128, 8
        $region16: #{tpu_custom_call.1} parent=11 // pred_fallthru
          _
      $region12: #{tpu_custom_call.1} parent=5 // pred_fallthru
        _
      %p116 = scmp.lt.s32.totalorder %s15, 2
      // Predicated region
      $region17: #{tpu_custom_call.1} parent=5 // pred_check
        %p117 = pneg %p116
      $region18: #{tpu_custom_call.1} parent=5 // pred_check_branch
        %119 = sbr.rel (%p117) target = $region20
      $region19: #{tpu_custom_call.1} parent=5 // pred_region
        // Predicated region
        $region21: #{tpu_custom_call.1} parent=19 // pred_check
          %p120 = pneg %p35
        $region22: #{tpu_custom_call.1} parent=19 // pred_check_branch
          %122 = sbr.rel (%p120) target = $region24
        $region23: #{tpu_custom_call.1} parent=19 // pred_region
          %s123 = sand.u32 %s25, 1
          %s124 = scalar_lea.sflag [#allocation3], %s123
          %s125 = sand.u32 %s25, 1
          %s126 = smul.addr %s125, 8
          %s127 = scalar_lea.vmem [#allocation2], %s126
          %s129 = ssub.s32 128, 128
          %130 = vsyncadd %s124, %s129
          %s131 = smul.addr %s15, 128
          %s132 = scalar_lea.hbm %s0, %s131
          %s134 = sshll.u32 %s127, 4
          %s135 = int_to_ptr.vmem [resolvable:$true] %s134
          %137 = dma.hbm_to_vmem [thread:$0]  %s132, 128, %s135, %s124
        $region24: #{tpu_custom_call.1} parent=19 // pred_fallthru
          _
      $region20: #{tpu_custom_call.1} parent=5 // pred_fallthru
        _
      %p138 = scmp.le.s32.totalorder 1, %s15
      %p139 = scmp.lt.s32.totalorder %s15, 3
      %p140 = pnand %p138, %p139
      %p141 = pneg %p140
      // Predicated region
      $region25: #{tpu_custom_call.1} parent=5 // pred_check
        _
      $region26: #{tpu_custom_call.1} parent=5 // pred_check_branch
        %143 = sbr.rel (%p140) target = $region28
      $region27: #{tpu_custom_call.1} parent=5 // pred_region
        %s144 = ssub.s32 %s15, 1
        %s145 = sand.u32 %s28, 1
        %s146 = scalar_lea.sflag [#allocation3], %s145
        %s147 = sand.u32 %s28, 1
        %s148 = smul.addr %s147, 8
        %s149 = scalar_lea.vmem [#allocation2], %s148
        // Predicated region
        $region29: #{tpu_custom_call.1} parent=27 // pred_check
          %p150 = pneg %p41
        $region30: #{tpu_custom_call.1} parent=27 // pred_check_branch
          %152 = sbr.rel (%p150) target = $region32
        $region31: #{tpu_custom_call.1} parent=27 // pred_region
          %153 = dma.done %s146, 128
        $region32: #{tpu_custom_call.1} parent=27 // pred_fallthru
          _
        // Predicated region
        $region33: #{tpu_custom_call.1} parent=27 // pred_check
          %p154 = pneg %p62
        $region34: #{tpu_custom_call.1} parent=27 // pred_check_branch
          %156 = sbr.rel (%p154) target = $region36
        $region35: #{tpu_custom_call.1} parent=27 // pred_region
          %157 = dma.done [#allocation6], 256
        $region36: #{tpu_custom_call.1} parent=27 // pred_fallthru
          _
        %s158 = sand.u32 %s28, 1
        %s159 = scalar_lea.sflag [#allocation3], %s158
        %s160 = sand.u32 %s28, 1
        %s161 = smul.addr %s160, 8
        %s162 = scalar_lea.vmem [#allocation2], %s161
        %p163 = pneg %p41
        %p164 = pneg %p38
        %p165 = pneg %p62
        %p166 = pneg %p59
        %p167 = pneg %p88
        %p168 = pneg %p85
        %s169 = sand.u32 %s75, 1
        %s170 = scalar_lea.sflag [#allocation4], %s169
        %s171 = sand.u32 %s75, 1
        %s172 = smul.addr %s171, 8
        %s173 = scalar_lea.vmem [#allocation7], %s172
        %v174 = vld [vmem:[%s149] sm:$0xff]
        %v175 = vld [vmem:[#allocation5] sm:$0xff]
        %v176 = vld [vmem:[#allocation5 + $0x8] sm:$0xff]
        %vm177 = vcmask 130048
        %v179 = vsel %vm177, %v174, 0
        %181 = vmatprep.subr.mxu0 0.0
        %182 = vmatpush1.msra.mxu0 %v175
        %183 = vmatprep.subr.mxu0 0.0
        %184 = vmatpush1.msra.mxu0 %v176
        %185 = vmatprep.subr.mxu0 0.0
        %186 = vmatpush1.msra.mxu0 0.0
        %187 = vmatprep.subr.mxu0 0.0
        %188 = vmatpush1.msra.mxu0 0.0
        %189 = vmatprep.subr.mxu0 0.0
        %190 = vmatpush1.msra.mxu0 0.0
        %191 = vmatprep.subr.mxu0 0.0
        %192 = vmatpush1.msra.mxu0 0.0
        %193 = vmatprep.subr.mxu0 0.0
        %194 = vmatpush1.msra.mxu0 0.0
        %195 = vmatprep.subr.mxu0 0.0
        %196 = vmatpush1.msra.mxu0 0.0
        %197 = vmatprep.subr.mxu0 0.0
        %198 = vmatpush1.msra.mxu0 0.0
        %199 = vmatprep.subr.mxu0 0.0
        %200 = vmatpush1.msra.mxu0 0.0
        %201 = vmatprep.subr.mxu0 0.0
        %202 = vmatpush1.msra.mxu0 0.0
        %203 = vmatprep.subr.mxu0 0.0
        %204 = vmatpush1.msra.mxu0 0.0
        %205 = vmatprep.subr.mxu0 0.0
        %206 = vmatpush1.msra.mxu0 0.0
        %207 = vmatprep.subr.mxu0 0.0
        %208 = vmatpush1.msra.mxu0 0.0
        %209 = vmatprep.subr.mxu0 0.0
        %210 = vmatpush1.msra.mxu0 0.0
        %211 = vmatprep.subr.mxu0 0.0
        %212 = vmatpush1.msra.mxu0 0.0
        %213 = vmatprep.subr.mxu0 0.0
        %214 = vmatpush1.msra.mxu0 0.0
        %215 = vmatprep.subr.mxu0 0.0
        %216 = vmatpush1.msra.mxu0 0.0
        %217 = vmatprep.subr.mxu0 0.0
        %218 = vmatpush1.msra.mxu0 0.0
        %219 = vmatprep.subr.mxu0 0.0
        %220 = vmatpush1.msra.mxu0 0.0
        %221 = vmatprep.subr.mxu0 0.0
        %222 = vmatpush1.msra.mxu0 0.0
        %223 = vmatprep.subr.mxu0 0.0
        %224 = vmatpush1.msra.mxu0 0.0
        %225 = vmatprep.subr.mxu0 0.0
        %226 = vmatpush1.msra.mxu0 0.0
        %227 = vmatprep.subr.mxu0 0.0
        %228 = vmatpush1.msra.mxu0 0.0
        %229 = vmatprep.subr.mxu0 0.0
        %230 = vmatpush1.msra.mxu0 0.0
        %231 = vmatprep.subr.mxu0 0.0
        %232 = vmatpush1.msra.mxu0 0.0
        %233 = vmatprep.subr.mxu0 0.0
        %234 = vmatpush1.msra.mxu0 0.0
        %235 = vmatprep.subr.mxu0 0.0
        %236 = vmatpush1.msra.mxu0 0.0
        %237 = vmatprep.subr.mxu0 0.0
        %238 = vmatpush1.msra.mxu0 0.0
        %239 = vmatprep.subr.mxu0 0.0
        %240 = vmatpush1.msra.mxu0 0.0
        %241 = vmatprep.subr.mxu0 0.0
        %242 = vmatpush1.msra.mxu0 0.0
        %243 = vmatprep.subr.mxu0 0.0
        %244 = vmatpush1.msra.mxu0 0.0
        %245 = vmatprep.mubr.f32.mxu0 0.0
        %246 = vmatmul.mubr.f32.gmra.mrb[0].mxu0 %v179
        %v247 = vpop.f32.mrb[0].mxu0
        %v248 = vadd.f32 0.0, %v247
        %v249 = vpop.f32.mrb[0].mxu0
        %250 = vdwg.mxu0
        %vm251 = vcmask 523264
        %252 = vst.msk [vmem:[%s173] sm:$0xff] %vm251, %v248
        %s253 = sand.u32 %s75, 1
        %s254 = scalar_lea.sflag [#allocation4], %s253
        %s255 = sand.u32 %s75, 1
        %s256 = smul.addr %s255, 8
        %s257 = scalar_lea.vmem [#allocation7], %s256
        // Predicated region
        $region37: #{tpu_custom_call.1} parent=27 // pred_check
          %p258 = pneg %p85
        $region38: #{tpu_custom_call.1} parent=27 // pred_check_branch
          %260 = sbr.rel (%p258) target = $region40
        $region39: #{tpu_custom_call.1} parent=27 // pred_region
          %s262 = ssub.s32 128, 128
          %263 = vsyncadd %s254, %s262
          %s264 = smul.addr %s20, 128
          %s265 = scalar_lea.hbm %s2, %s264
          %s267 = sshll.u32 %s257, 4
          %s268 = int_to_ptr.vmem [resolvable:$true] %s267
          %270 = dma.vmem_to_hbm [thread:$0]  %s268, 128, %s265, %s254
        $region40: #{tpu_custom_call.1} parent=27 // pred_fallthru
          _
      $region28: #{tpu_custom_call.1} parent=5 // pred_fallthru
        _
      %p271 = scmp.le.s32.totalorder 2, %s15
      // Predicated region
      $region41: #{tpu_custom_call.1} parent=5 // pred_check
        %p272 = pneg %p271
      $region42: #{tpu_custom_call.1} parent=5 // pred_check_branch
        %274 = sbr.rel (%p272) target = $region44
      $region43: #{tpu_custom_call.1} parent=5 // pred_region
        %s275 = ssub.s32 %s15, 2
        // Predicated region
        $region45: #{tpu_custom_call.1} parent=43 // pred_check
          %p276 = pneg %p91
        $region46: #{tpu_custom_call.1} parent=43 // pred_check_branch
          %278 = sbr.rel (%p276) target = $region48
        $region47: #{tpu_custom_call.1} parent=43 // pred_region
          %s279 = sand.u32 %s76, 1
          %s280 = scalar_lea.sflag [#allocation4], %s279
          %s281 = sand.u32 %s76, 1
          %s282 = smul.addr %s281, 8
          %s283 = scalar_lea.vmem [#allocation7], %s282
          %284 = dma.done %s280, 128
        $region48: #{tpu_custom_call.1} parent=43 // pred_fallthru
          _
      $region44: #{tpu_custom_call.1} parent=5 // pred_fallthru
        _
    $region6: #{tpu_custom_call.1} parent=1 // loop_footer
      %s19 = sadd.s32 1, %s15
    $region7: #{tpu_custom_call.1} parent=1 // loop_footer_branch
      %14 = sbr.rel target = $region3
    $region8: #{tpu_custom_call.1} parent=1 // loop_exit
      _
    %285 = vsyncpa [#allocation3], 1
    %s286 = scalar_lea.sflag [#allocation3], 1
    %287 = vsyncpa %s286, 1
    %288 = vsyncpa [#allocation6], 1
    %289 = vsyncpa [#allocation4], 1
    %s290 = scalar_lea.sflag [#allocation4], 1
    %291 = vsyncpa %s290, 1

</llo_original>
